<compile_context>
chip_gen: v7x
topology: tpu7x:2x2x1
jax: 0.10.0
libtpu: 0.0.40
codegen_flags: <defaults>
</compile_context>

<pallas_src>
import functools

import jax
import jax.numpy as jnp
from jax.experimental import pallas as pl
from jax.experimental.pallas import tpu as pltpu

LOGVAR_INIT = -5.0
MU_INIT = 0.0

_LANE = 128


def _round_up(n, m):
    return ((n + m - 1) // m) * m


def _softplus(v):
    # Numerically stable softplus: max(v, 0) + log1p(exp(-|v|)).
    return jnp.maximum(v, 0.0) + jnp.log1p(jnp.exp(-jnp.abs(v)))


def _bayesian_nn_kernel(x_ref, p_ref, out_ref, *, d_in):
    x = x_ref[...]                                   # (TB, D_in)
    p = p_ref[...]                                   # (3, D_in+3, HP): mu/rho/eps

    # --- sample all parameters at once (reparameterization), VPU/EUP work ---
    sampled = p[0] + _softplus(p[1]) * p[2]          # (D_in+3, HP)
    w1 = sampled[0:d_in, :]                          # (D_in, HP)  = W1^T
    b1 = sampled[d_in:d_in + 1, :]                   # (1, HP)
    w2 = sampled[d_in + 1:d_in + 2, :]               # (1, HP)     = W2 row
    b2 = sampled[d_in + 2:d_in + 3, 0:1]             # (1, 1)

    # --- layer 1: MXU matmul, natural (K-last, K-first) contraction ---
    h = jnp.dot(x, w1, preferred_element_type=jnp.float32)   # (TB, HP)
    h = jnp.maximum(h + b1, 0.0)

    # --- layer 2: N=1 "matmul" as VPU multiply + cross-lane (XLU) reduction ---
    y = jnp.sum(h * w2, axis=-1, keepdims=True) + b2          # (TB, 1)

    # Lane-dense store: broadcast across 128 lanes -> unmasked full-lane vst.
    out_ref[...] = jnp.broadcast_to(y, out_ref.shape)


def bayesian_nn_forward(x, params, eps, *, batch_tile=512):
    """Fused Bayesian MLP forward.

    x:      (B, D_in) float32
    params: dict of mu/rho in torch nn.Linear layout (weights (out, in), biases (out,))
    eps:    dict of matching Gaussian noise tensors
    returns (B, 1) float32
    """
    B, d_in = x.shape
    H = params["mu_b1"].shape[-1]
    HP = _round_up(H, _LANE)            # hidden dim padded to lane width
    out_lanes = _LANE

    # ---- pack & layout-transform parameters (pure XLA plumbing in the wrapper) ----
    def plane(w1_, b1_, w2_, b2_):
        # rows 0..d_in-1: W1^T (zero-padded to HP lanes); rows d_in..d_in+2: b1, w2, b2
        wt = jnp.pad(jnp.asarray(w1_, jnp.float32).T, ((0, 0), (0, HP - H)))

        def row(v):
            v = jnp.reshape(jnp.asarray(v, jnp.float32), (1, -1))
            return jnp.pad(v, ((0, 0), (0, HP - v.shape[1])))

        return jnp.concatenate([wt, row(b1_), row(w2_), row(b2_)], axis=0)

    # Zero padding is exact: padded hidden units get mu=rho=eps=0 -> sampled w/b = 0,
    # and w2 = 0 in those lanes, so they contribute nothing to the output.
    param_pack = jnp.stack([
        plane(params["mu_w1"], params["mu_b1"], params["mu_w2"], params["mu_b2"]),
        plane(params["rho_w1"], params["rho_b1"], params["rho_w2"], params["rho_b2"]),
        plane(eps["w1"], eps["b1"], eps["w2"], eps["b2"]),
    ])                                   # (3, d_in + 3, HP)

    # ---- batch tiling ----
    tb = min(_round_up(batch_tile, 8), _round_up(B, 8))
    b_pad = _round_up(B, tb)
    if b_pad != B:
        x = jnp.pad(x, ((0, b_pad - B), (0, 0)))
    grid = (b_pad // tb,)

    out = pl.pallas_call(
        functools.partial(_bayesian_nn_kernel, d_in=d_in),
        out_shape=jax.ShapeDtypeStruct((b_pad, out_lanes), jnp.float32),
        grid=grid,
        in_specs=[
            pl.BlockSpec((tb, d_in), lambda i: (i, 0)),              # x: tiled batch
            pl.BlockSpec((3, d_in + 3, HP), lambda i: (0, 0, 0)),    # params: resident
        ],
        out_specs=pl.BlockSpec((tb, out_lanes), lambda i: (i, 0)),
        compiler_params=pltpu.CompilerParams(
            dimension_semantics=("parallel",),
        ),
    )(x, param_pack)

    return out[:B, :1]


def init_params(key, input_dim, hidden_dim):
    """Deterministic parameter init mirroring BayesianLinear.__init__ (torch layout)."""
    ks = jax.random.split(key, 8)
    n = lambda k, shape, mean: mean + 0.1 * jax.random.normal(k, shape, jnp.float32)
    return {
        "mu_w1": n(ks[0], (hidden_dim, input_dim), MU_INIT),
        "rho_w1": n(ks[1], (hidden_dim, input_dim), LOGVAR_INIT),
        "mu_b1": n(ks[2], (hidden_dim,), MU_INIT),
        "rho_b1": n(ks[3], (hidden_dim,), LOGVAR_INIT),
        "mu_w2": n(ks[4], (1, hidden_dim), MU_INIT),
        "rho_w2": n(ks[5], (1, hidden_dim), LOGVAR_INIT),
        "mu_b2": n(ks[6], (1,), MU_INIT),
        "rho_b2": n(ks[7], (1,), LOGVAR_INIT),
    }


def sample_eps(key, input_dim, hidden_dim):
    """Gaussian noise for the reparameterization trick (torch.randn_like)."""
    ks = jax.random.split(key, 4)
    return {
        "w1": jax.random.normal(ks[0], (hidden_dim, input_dim), jnp.float32),
        "b1": jax.random.normal(ks[1], (hidden_dim,), jnp.float32),
        "w2": jax.random.normal(ks[2], (1, hidden_dim), jnp.float32),
        "b2": jax.random.normal(ks[3], (1,), jnp.float32),
    }


def reference_forward(x, params, eps):
    """Pure-JAX reference of the same forward pass for verification."""
    sp = lambda v: jnp.maximum(v, 0.0) + jnp.log1p(jnp.exp(-jnp.abs(v)))
    w1 = params["mu_w1"] + sp(params["rho_w1"]) * eps["w1"]
    b1 = params["mu_b1"] + sp(params["rho_b1"]) * eps["b1"]
    w2 = params["mu_w2"] + sp(params["rho_w2"]) * eps["w2"]
    b2 = params["mu_b2"] + sp(params["rho_b2"]) * eps["b2"]
    h = jnp.maximum(x @ w1.T + b1, 0.0)
    return h @ w2.T + b2


if __name__ == "__main__":
    # Small shapes consistent with NN(input_dim=2, hidden_dim=50) forward;
    # B=10 exercises the batch-padding path as well.
    B, INPUT_DIM, HIDDEN_DIM = 10, 2, 50

    root = jax.random.PRNGKey(0)
    k_x, k_params, k_eps = jax.random.split(root, 3)

    x = jax.random.normal(k_x, (B, INPUT_DIM), jnp.float32)
    params = init_params(k_params, INPUT_DIM, HIDDEN_DIM)
    eps = sample_eps(k_eps, INPUT_DIM, HIDDEN_DIM)

    out = bayesian_nn_forward(x, params, eps)
    out = jax.block_until_ready(out)

    ref = reference_forward(x, params, eps)
    assert out.shape == (B, 1), out.shape
    assert jnp.allclose(out, ref, atol=1e-4, rtol=1e-4), (out, ref)

    print("KERNEL_OK")
</pallas_src>

<mosaic_0001>
module attributes {stable_mosaic.version = 11 : i64} {
  func.func @_bayesian_nn_kernel(%arg0: i32, %arg1: memref<16x2xf32, #tpu.memory_space<vmem>>, %arg2: memref<3x5x128xf32, #tpu.memory_space<vmem>>, %arg3: memref<16x128xf32, #tpu.memory_space<vmem>>) attributes {dimension_semantics = [#tpu.dimension_semantics<parallel>], iteration_bounds = array<i64: 1>, scalar_prefetch = 0 : i64, scratch_operands = 0 : i64, tpu.core_type = #tpu.core_type<tc>, window_params = [{transform_indices = @transform_0, window_bounds = array<i64: 16, 2>}, {pipeline_mode = #tpu.pipeline_mode<synchronous>, transform_indices = @transform_1, window_bounds = array<i64: 3, 5, 128>}, {transform_indices = @transform_2, window_bounds = array<i64: 16, 128>}]} {
    %c0 = arith.constant 0 : index
    %c0_0 = arith.constant 0 : index
    %0 = vector.load %arg1[%c0, %c0_0] : memref<16x2xf32, #tpu.memory_space<vmem>>, vector<16x2xf32>
    %c0_1 = arith.constant 0 : index
    %c0_2 = arith.constant 0 : index
    %c0_3 = arith.constant 0 : index
    %1 = vector.load %arg2[%c0_1, %c0_2, %c0_3] : memref<3x5x128xf32, #tpu.memory_space<vmem>>, vector<3x5x128xf32>
    %2 = vector.extract_strided_slice %1 {offsets = [0, 0, 0], sizes = [1, 5, 128], strides = [1, 1, 1]} : vector<3x5x128xf32> to vector<1x5x128xf32>
    %3 = vector.shape_cast %2 : vector<1x5x128xf32> to vector<5x128xf32>
    %4 = vector.extract_strided_slice %1 {offsets = [1, 0, 0], sizes = [1, 5, 128], strides = [1, 1, 1]} : vector<3x5x128xf32> to vector<1x5x128xf32>
    %5 = vector.shape_cast %4 : vector<1x5x128xf32> to vector<5x128xf32>
    %cst = arith.constant 0.000000e+00 : f32
    %6 = vector.broadcast %cst : f32 to vector<5x128xf32>
    %7 = arith.maximumf %5, %6 : vector<5x128xf32>
    %8 = math.absf %5 : vector<5x128xf32>
    %cst_4 = arith.constant 0.000000e+00 : f32
    %9 = vector.broadcast %cst_4 : f32 to vector<5x128xf32>
    %10 = arith.subf %9, %8 : vector<5x128xf32>
    %11 = math.exp %10 : vector<5x128xf32>
    %12 = math.log1p %11 : vector<5x128xf32>
    %13 = arith.addf %7, %12 : vector<5x128xf32>
    %14 = vector.extract_strided_slice %1 {offsets = [2, 0, 0], sizes = [1, 5, 128], strides = [1, 1, 1]} : vector<3x5x128xf32> to vector<1x5x128xf32>
    %15 = vector.shape_cast %14 : vector<1x5x128xf32> to vector<5x128xf32>
    %16 = arith.mulf %13, %15 : vector<5x128xf32>
    %17 = arith.addf %3, %16 : vector<5x128xf32>
    %18 = vector.extract_strided_slice %17 {offsets = [0, 0], sizes = [2, 128], strides = [1, 1]} : vector<5x128xf32> to vector<2x128xf32>
    %19 = vector.extract_strided_slice %17 {offsets = [2, 0], sizes = [1, 128], strides = [1, 1]} : vector<5x128xf32> to vector<1x128xf32>
    %20 = vector.extract_strided_slice %17 {offsets = [3, 0], sizes = [1, 128], strides = [1, 1]} : vector<5x128xf32> to vector<1x128xf32>
    %21 = vector.extract_strided_slice %17 {offsets = [4, 0], sizes = [1, 1], strides = [1, 1]} : vector<5x128xf32> to vector<1x1xf32>
    %cst_5 = arith.constant dense<0.000000e+00> : vector<16x128xf32>
    %22 = tpu.matmul %0, %18, %cst_5 {dimension_numbers = #tpu.dot_dimension_numbers<[1], [0], [0], [1], [0, 0, 1, 1], [], []>} : vector<16x2xf32>, vector<2x128xf32>, vector<16x128xf32> -> vector<16x128xf32>
    %23 = vector.broadcast %19 : vector<1x128xf32> to vector<16x128xf32>
    %24 = arith.addf %22, %23 : vector<16x128xf32>
    %cst_6 = arith.constant 0.000000e+00 : f32
    %25 = vector.broadcast %cst_6 : f32 to vector<16x128xf32>
    %26 = arith.maximumf %24, %25 : vector<16x128xf32>
    %27 = vector.broadcast %20 : vector<1x128xf32> to vector<16x128xf32>
    %28 = arith.mulf %26, %27 : vector<16x128xf32>
    %cst_7 = arith.constant dense<0.000000e+00> : vector<16xf32>
    %29 = vector.multi_reduction <add>, %28, %cst_7 [1] : vector<16x128xf32> to vector<16xf32>
    %30 = vector.shape_cast %29 : vector<16xf32> to vector<16x1xf32>
    %31 = vector.broadcast %21 : vector<1x1xf32> to vector<16x1xf32>
    %32 = arith.addf %30, %31 : vector<16x1xf32>
    %33 = vector.shape_cast %32 : vector<16x1xf32> to vector<16x1xf32>
    %34 = vector.broadcast %33 : vector<16x1xf32> to vector<16x128xf32>
    %c0_8 = arith.constant 0 : index
    %c0_9 = arith.constant 0 : index
    %35 = vector.load %arg3[%c0_8, %c0_9] : memref<16x128xf32, #tpu.memory_space<vmem>>, vector<16x128xf32>
    tpu.vector_store %arg3[%c0_8, %c0_9], %34 {strides = array<i32>} : memref<16x128xf32, #tpu.memory_space<vmem>>, vector<16x128xf32>,
    return
  }
  func.func @transform_0(%arg0: i32) -> (i32, i32) {
    %c0_i32 = arith.constant 0 : i32
    %c0_i32_0 = arith.constant 0 : i32
    return %arg0, %c0_i32 : i32, i32
  }
  func.func @transform_1(%arg0: i32) -> (i32, i32, i32) {
    %c0_i32 = arith.constant 0 : i32
    %c0_i32_0 = arith.constant 0 : i32
    %c0_i32_1 = arith.constant 0 : i32
    %c0_i32_2 = arith.constant 0 : i32
    return %c0_i32, %c0_i32_0, %c0_i32_1 : i32, i32, i32
  }
  func.func @transform_2(%arg0: i32) -> (i32, i32) {
    %c0_i32 = arith.constant 0 : i32
    %c0_i32_0 = arith.constant 0 : i32
    return %arg0, %c0_i32 : i32, i32
  }
}

</mosaic_0001>

<llo_original>
// kernel: tpu_custom_call.1
$region0: #{tpu_custom_call.1}
  #allocation0 [shape = 'u32[]', space=smem, size = 0x4, offset = 0x4, fixed_abs, tag = 'smem constant byte address 0x4 - core index']
  #allocation1 [shape = 'u32[144,128]{1,0:T(1,128)}', space=vmem, size = 0x12000, scoped, tag = 'internal scratch']
  %s0 = inlined_call_operand.vmem [shape: f32[16,2], index: 0, kind: input, shape index: {}]
  %s1 = inlined_call_operand.vmem [shape: f32[3,5,128], index: 1, kind: input, shape index: {}]
  %s2 = inlined_call_operand.hbm [shape: f32[16,128], index: 2, kind: output, shape index: {}]
  %s3 = sld [smem:[#allocation0]]
  $region18: #{tpu_custom_call.1} parent=0
    _
  %s5 = ssub.s32 1, %s3
  %s6 = scalar_select 0, %s5, %s3
  $region1: #{tpu_custom_call.1} parent=0
    #allocation2 [shape = 'u8[8192]{0}', space=vmem, size = 0x2000, scoped, tag = 'output window, operand 0, single buffered']
    #allocation3 [shape = 's32[1]{0}', space=sflag, size = 0x4, scoped, tag = 'scoped memory for tpu_custom_call.1']
    %7 = vsyncpa [#allocation3], 0
    // Predicated region
    $region2: #{tpu_custom_call.1} parent=1 // pred_check
      _
    $region3: #{tpu_custom_call.1} parent=1 // pred_check_branch
      %9 = sbr.rel (0) target = $region5
    $region4: #{tpu_custom_call.1} parent=1 // pred_region
      _
    $region5: #{tpu_custom_call.1} parent=1 // pred_fallthru
      _
    // Predicated region
    $region6: #{tpu_custom_call.1} parent=1 // pred_check
      _
    $region7: #{tpu_custom_call.1} parent=1 // pred_check_branch
      %11 = sbr.rel (0) target = $region9
    $region8: #{tpu_custom_call.1} parent=1 // pred_region
      _
    $region9: #{tpu_custom_call.1} parent=1 // pred_fallthru
      _
    %v12 = vld [vmem:[%s0] sm:$0xff]
    %v13 = vld [vmem:[%s0 + $0x8] sm:$0xff]
    %v14 = vld [vmem:[%s1] sm:$0x1f]
    %v15 = vld [vmem:[%s1 + $0x8] sm:$0x1f]
    %v16 = vld [vmem:[%s1 + $0x10] sm:$0x1f]
    %v17 = vmax.f32 %v15, 0.0
    %v18 = vand.u32 2147483647, %v15
    %v19 = vsub.f32 0.0, %v18
    %v20 = vmul.f32 %v19, 1.442695
    %v21 = vpow.pop %v20
    %v22 = vadd.f32 %v21, 1.0
    %v23 = vlog2.pop %v22
    %v24 = vmul.f32 %v23, 0.6931472
    %v25 = vmul.f32 -0.5, %v21
    %v26 = vadd.f32 %v25, 1.0
    %v27 = vmul.f32 %v26, %v21
    %v28 = vand.u32 2147483647, %v21
    %vm29 = vcmp.lt.f32.partialorder %v28, 0.0004427343
    %v30 = vsel %vm29, %v27, %v24
    %v31 = vadd.f32 %v17, %v30
    %v32 = vmul.f32 %v31, %v16
    %v33 = vadd.f32 %v14, %v32
    %v34 = vlaneseq
    %v35 = vshrl.u32 %v34, 7
    %v36 = vsub.s32 2, %v35
    %v37 = vrot.slane %v33, %v36
    %vm38 = vcmask 15360
    %v40 = vsel %vm38, %v12, 0
    %v43 = vsel %vm38, %v13, 0
    %vm45 = vcmask 1041408
    %v47 = vsel %vm45, %v33, 0
    %49 = vmatprep.subr.mxu0 0.0
    %50 = vmatpush1.msra.mxu0 %v47
    %51 = vmatprep.subr.mxu0 0.0
    %52 = vmatpush1.msra.mxu0 0.0
    %53 = vmatprep.subr.mxu0 0.0
    %54 = vmatpush1.msra.mxu0 0.0
    %55 = vmatprep.subr.mxu0 0.0
    %56 = vmatpush1.msra.mxu0 0.0
    %57 = vmatprep.subr.mxu0 0.0
    %58 = vmatpush1.msra.mxu0 0.0
    %59 = vmatprep.subr.mxu0 0.0
    %60 = vmatpush1.msra.mxu0 0.0
    %61 = vmatprep.subr.mxu0 0.0
    %62 = vmatpush1.msra.mxu0 0.0
    %63 = vmatprep.subr.mxu0 0.0
    %64 = vmatpush1.msra.mxu0 0.0
    %65 = vmatprep.subr.mxu0 0.0
    %66 = vmatpush1.msra.mxu0 0.0
    %67 = vmatprep.subr.mxu0 0.0
    %68 = vmatpush1.msra.mxu0 0.0
    %69 = vmatprep.subr.mxu0 0.0
    %70 = vmatpush1.msra.mxu0 0.0
    %71 = vmatprep.subr.mxu0 0.0
    %72 = vmatpush1.msra.mxu0 0.0
    %73 = vmatprep.subr.mxu0 0.0
    %74 = vmatpush1.msra.mxu0 0.0
    %75 = vmatprep.subr.mxu0 0.0
    %76 = vmatpush1.msra.mxu0 0.0
    %77 = vmatprep.subr.mxu0 0.0
    %78 = vmatpush1.msra.mxu0 0.0
    %79 = vmatprep.subr.mxu0 0.0
    %80 = vmatpush1.msra.mxu0 0.0
    %81 = vmatprep.subr.mxu0 0.0
    %82 = vmatpush1.msra.mxu0 0.0
    %83 = vmatprep.subr.mxu0 0.0
    %84 = vmatpush1.msra.mxu0 0.0
    %85 = vmatprep.subr.mxu0 0.0
    %86 = vmatpush1.msra.mxu0 0.0
    %87 = vmatprep.subr.mxu0 0.0
    %88 = vmatpush1.msra.mxu0 0.0
    %89 = vmatprep.subr.mxu0 0.0
    %90 = vmatpush1.msra.mxu0 0.0
    %91 = vmatprep.subr.mxu0 0.0
    %92 = vmatpush1.msra.mxu0 0.0
    %93 = vmatprep.subr.mxu0 0.0
    %94 = vmatpush1.msra.mxu0 0.0
    %95 = vmatprep.subr.mxu0 0.0
    %96 = vmatpush1.msra.mxu0 0.0
    %97 = vmatprep.subr.mxu0 0.0
    %98 = vmatpush1.msra.mxu0 0.0
    %99 = vmatprep.subr.mxu0 0.0
    %100 = vmatpush1.msra.mxu0 0.0
    %101 = vmatprep.subr.mxu0 0.0
    %102 = vmatpush1.msra.mxu0 0.0
    %103 = vmatprep.subr.mxu0 0.0
    %104 = vmatpush1.msra.mxu0 0.0
    %105 = vmatprep.subr.mxu0 0.0
    %106 = vmatpush1.msra.mxu0 0.0
    %107 = vmatprep.subr.mxu0 0.0
    %108 = vmatpush1.msra.mxu0 0.0
    %109 = vmatprep.subr.mxu0 0.0
    %110 = vmatpush1.msra.mxu0 0.0
    %111 = vmatprep.subr.mxu0 0.0
    %112 = vmatpush1.msra.mxu0 0.0
    %113 = vmatprep.mubr.f32.mxu0 0.0
    %114 = vmatmul.mubr.f32.gmra.mrb[0].mxu0 %v40
    %v115 = vpop.f32.mrb[0].mxu0
    %v116 = vadd.f32 %v37, %v115
    %v117 = vpop.f32.mrb[0].mxu0
    %118 = vmatprep.mubr.f32.mxu0 0.0
    %119 = vmatmul.mubr.f32.gmra.mrb[0].mxu0 %v43
    %v120 = vpop.f32.mrb[0].mxu0
    %v121 = vadd.f32 %v37, %v120
    %v122 = vpop.f32.mrb[0].mxu0
    %123 = vdwg.mxu0
    %v124 = vmax.f32 %v116, 0.0
    %v125 = vmax.f32 %v121, 0.0
    %v126 = vlaneseq
    %v127 = vshrl.u32 %v126, 7
    %v128 = vsub.s32 3, %v127
    %v129 = vrot.slane %v33, %v128
    %v130 = vmul.f32 %v124, %v129
    %v131 = vmul.f32 %v125, %v129
    %132 = vadd.xlane.f32.xlu0 %v130
    %v133 = vpop.xlane.xlu0 %132
    %134 = vadd.xlane.f32.xlu0 %v131
    %v135 = vpop.xlane.xlu0 %134
    %v136 = vlaneseq
    %v137 = vshrl.u32 %v136, 7
    %v138 = vsub.s32 4, %v137
    %v139 = vrot.slane %v33, %v138
    %v140 = vadd.f32 %v133, %v139
    %v141 = vadd.f32 %v135, %v139
    %143 = vset.pattern.permute.xlu0 0
    %144 = vperm.xlu0 %143, %v140
    %v145 = vpop.permute.xlu0 %144
    %148 = vset.pattern.permute.xlu0 0
    %149 = vperm.xlu0 %148, %v141
    %v150 = vpop.permute.xlu0 %149
    %152 = vst [vmem:[#allocation2] sm:$0xff] %v145
    %153 = vst [vmem:[#allocation2 + $0x8] sm:$0xff] %v150
    // Predicated region
    $region10: #{tpu_custom_call.1} parent=1 // pred_check
      _
    $region11: #{tpu_custom_call.1} parent=1 // pred_check_branch
      %155 = sbr.rel (0) target = $region13
    $region12: #{tpu_custom_call.1} parent=1 // pred_region
      %s157 = ssub.s32 256, 256
      %158 = vsyncadd [#allocation3], %s157
      %s159 = sshll.u32 [#allocation2], 4
      %s160 = int_to_ptr.vmem [resolvable:$true] %s159
      %165 = dma.vmem_to_hbm [thread:$0]  %s160, 256, %s2, [#allocation3], 128, 128, 8
    $region13: #{tpu_custom_call.1} parent=1 // pred_fallthru
      _
    // Predicated region
    $region14: #{tpu_custom_call.1} parent=1 // pred_check
      _
    $region15: #{tpu_custom_call.1} parent=1 // pred_check_branch
      %167 = sbr.rel (0) target = $region17
    $region16: #{tpu_custom_call.1} parent=1 // pred_region
      %168 = dma.done [#allocation3], 256
    $region17: #{tpu_custom_call.1} parent=1 // pred_fallthru
      _
    %169 = vsyncpa [#allocation3], 1

</llo_original>
